<compile_context>
chip_gen: v6e
topology: v6e:2x2x1
jax: 0.10.0
libtpu: 0.0.40
codegen_flags: <defaults>
</compile_context>

<pallas_src>
import functools

import jax
import jax.numpy as jnp
from jax import lax
from jax.experimental import pallas as pl
from jax.experimental.pallas import tpu as pltpu

_MB = 1024 * 1024


# ------------------------------ helpers -----------------------------------

def _sublane_align(dtype):
    return {4: 8, 2: 16, 1: 32}.get(jnp.dtype(dtype).itemsize, 8)


def _pick_tile(dim, cap, align):
    """Largest multiple of `align` that is <= cap and divides `dim`.
    If dim <= cap, use the full dim (always a legal block).  If no aligned
    divisor exists (e.g. prime dims), fall back to the full dimension rather
    than emitting a misaligned / degenerate tile."""
    if dim <= cap:
        return dim
    t = (cap // align) * align
    while t >= align:
        if dim % t == 0:
            return t
        t -= align
    return dim


# ----------------------------- Linear kernels -------------------------------

def _linear_kernel(x_ref, w_ref, b_ref, o_ref):
    # Single pass over K: no accumulator scratch, tile written exactly once.
    o_ref[...] = (
        jnp.dot(x_ref[...], w_ref[...], preferred_element_type=jnp.float32)
        + b_ref[...].astype(jnp.float32)
    ).astype(o_ref.dtype)


def _linear_kernel_ksplit(x_ref, w_ref, b_ref, o_ref, acc_ref):
    k = pl.program_id(2)

    @pl.when(k == 0)
    def _():
        acc_ref[...] = jnp.zeros_like(acc_ref)

    acc_ref[...] += jnp.dot(
        x_ref[...], w_ref[...], preferred_element_type=jnp.float32
    )

    @pl.when(k == pl.num_programs(2) - 1)
    def _():
        o_ref[...] = (acc_ref[...] + b_ref[...].astype(jnp.float32)).astype(
            o_ref.dtype
        )


def linear(x, w, b):
    """y = x @ w + b.  x: (M, Ein), w: (Ein, Eout) (already transposed vs
    torch), b: (Eout,)."""
    M, Ein = x.shape
    Eout = w.shape[1]
    itemsize = jnp.dtype(x.dtype).itemsize
    tm = _pick_tile(M, 512, _sublane_align(x.dtype))
    tn = _pick_tile(Eout, 512, 128)
    tk = _pick_tile(Ein, 512 if itemsize == 4 else 1024, 128)
    b2 = b.reshape(1, Eout)

    cost = pl.CostEstimate(
        flops=2 * M * Ein * Eout,
        transcendentals=0,
        bytes_accessed=(M * Ein + Ein * Eout + M * Eout + Eout) * itemsize,
    )

    if tk == Ein:
        return pl.pallas_call(
            _linear_kernel,
            grid=(M // tm, Eout // tn),
            out_shape=jax.ShapeDtypeStruct((M, Eout), x.dtype),
            in_specs=[
                pl.BlockSpec((tm, Ein), lambda i, j: (i, 0)),
                pl.BlockSpec((Ein, tn), lambda i, j: (0, j)),
                pl.BlockSpec((1, tn), lambda i, j: (0, j)),
            ],
            out_specs=pl.BlockSpec((tm, tn), lambda i, j: (i, j)),
            compiler_params=pltpu.CompilerParams(
                dimension_semantics=("parallel", "parallel"),
                vmem_limit_bytes=32 * _MB,
            ),
            cost_estimate=cost,
        )(x, w, b2)

    return pl.pallas_call(
        _linear_kernel_ksplit,
        grid=(M // tm, Eout // tn, Ein // tk),
        out_shape=jax.ShapeDtypeStruct((M, Eout), x.dtype),
        in_specs=[
            pl.BlockSpec((tm, tk), lambda i, j, k: (i, k)),
            pl.BlockSpec((tk, tn), lambda i, j, k: (k, j)),
            pl.BlockSpec((1, tn), lambda i, j, k: (0, j)),
        ],
        out_specs=pl.BlockSpec((tm, tn), lambda i, j, k: (i, j)),
        scratch_shapes=[pltpu.VMEM((tm, tn), jnp.float32)],
        compiler_params=pltpu.CompilerParams(
            dimension_semantics=("parallel", "parallel", "arbitrary"),
            vmem_limit_bytes=32 * _MB,
        ),
        cost_estimate=cost,
    )(x, w, b2)


# ------------- Attention + back_shape + out_proj (fused), no probs ----------

def _flash_attn_outproj_kernel(q_ref, k_ref, v_ref, wo_ref, b_ref, o_ref,
                               m_sc, l_sc, acc_sc, out_sc):
    # q_ref: (1, tq, D)  k_ref/v_ref: (1, tkv, D)  wo_ref: (1, D, E)
    # b_ref: (1, E)      o_ref: (1, tq, E)
    h = pl.program_id(2)
    ki = pl.program_id(3)
    nh = pl.num_programs(2)
    nkv = pl.num_programs(3)

    @pl.when(jnp.logical_and(h == 0, ki == 0))
    def _():
        out_sc[...] = jnp.zeros_like(out_sc)

    @pl.when(ki == 0)
    def _():
        m_sc[...] = jnp.full_like(m_sc, -jnp.inf)
        l_sc[...] = jnp.zeros_like(l_sc)
        acc_sc[...] = jnp.zeros_like(acc_sc)

    q = q_ref[0]                                   # (tq, D)
    k = k_ref[0]                                   # (tkv, D)
    v = v_ref[0]                                   # (tkv, D)

    # NOTE: the PyTorch module applies NO 1/sqrt(head_dim) scaling.
    s = lax.dot_general(
        q, k, (((1,), (1,)), ((), ())), preferred_element_type=jnp.float32
    )                                              # (tq, tkv) f32
    m_new = jnp.maximum(m_sc[...], jnp.max(s, axis=-1, keepdims=True))
    alpha = jnp.exp(m_sc[...] - m_new)
    p = jnp.exp(s - m_new)
    l_sc[...] = alpha * l_sc[...] + jnp.sum(p, axis=-1, keepdims=True)
    acc_sc[...] = alpha * acc_sc[...] + jnp.dot(
        p.astype(v.dtype), v, preferred_element_type=jnp.float32
    )
    m_sc[...] = m_new

    @pl.when(ki == nkv - 1)
    def _():
        # Deferred normalization: scale the (tq, D) context, not (tq, S) probs.
        ctx = acc_sc[...] * pl.reciprocal(l_sc[...], approx=True)
        # Fused back_shape + out_proj: accumulate this head's contribution.
        out_sc[...] += jnp.dot(
            ctx.astype(wo_ref.dtype), wo_ref[0],
            preferred_element_type=jnp.float32,
        )

    @pl.when(jnp.logical_and(h == nh - 1, ki == nkv - 1))
    def _():
        o_ref[0] = (out_sc[...] + b_ref[...].astype(jnp.float32)).astype(
            o_ref.dtype
        )


def _attention_outproj(qkv_hm, wo_h, bo2, *, B, H, S, D,
                       tq_cap=512, tkv_cap=512):
    """qkv_hm: (3*B*H, S, D) head-major fused projection (q|k|v major).
    wo_h: (H, D, E) out-proj weight, bo2: (1, E).  Returns (B, S, E)."""
    E = H * D
    sub = _sublane_align(qkv_hm.dtype)
    tq = _pick_tile(S, tq_cap, sub)
    tkv = _pick_tile(S, tkv_cap, sub)
    nq = S // tq
    nkv = S // tkv
    itemsize = jnp.dtype(qkv_hm.dtype).itemsize

    cost = pl.CostEstimate(
        flops=4 * B * H * S * S * D + 2 * B * S * E * E,
        transcendentals=B * H * S * S,
        bytes_accessed=(4 * B * S * E + E * E + E) * itemsize,
    )

    return pl.pallas_call(
        _flash_attn_outproj_kernel,
        grid=(B, nq, H, nkv),
        out_shape=jax.ShapeDtypeStruct((B, S, E), qkv_hm.dtype),
        in_specs=[
            pl.BlockSpec((1, tq, D),
                         lambda b, qi, h, ki: (b * H + h, qi, 0)),
            pl.BlockSpec((1, tkv, D),
                         lambda b, qi, h, ki: (B * H + b * H + h, ki, 0)),
            pl.BlockSpec((1, tkv, D),
                         lambda b, qi, h, ki: (2 * B * H + b * H + h, ki, 0)),
            pl.BlockSpec((1, D, E), lambda b, qi, h, ki: (h, 0, 0)),
            pl.BlockSpec((1, E), lambda b, qi, h, ki: (0, 0)),
        ],
        out_specs=pl.BlockSpec((1, tq, E), lambda b, qi, h, ki: (b, qi, 0)),
        scratch_shapes=[
            pltpu.VMEM((tq, 1), jnp.float32),   # m (running max)
            pltpu.VMEM((tq, 1), jnp.float32),   # l (running denom)
            pltpu.VMEM((tq, D), jnp.float32),   # per-head context accumulator
            pltpu.VMEM((tq, E), jnp.float32),   # fused out_proj accumulator
        ],
        compiler_params=pltpu.CompilerParams(
            dimension_semantics=("parallel", "parallel",
                                 "arbitrary", "arbitrary"),
            vmem_limit_bytes=64 * _MB,
        ),
        cost_estimate=cost,
    )(qkv_hm, qkv_hm, qkv_hm, wo_h, bo2)


# -------- Attention + out_proj with materialized attention probs ------------

def _attn_probs_outproj_kernel(q_ref, k_ref, v_ref, wo_ref, b_ref,
                               o_ref, p_ref, out_sc):
    # q/k/v_ref: (1, S, D)  wo_ref: (1, D, E)  b_ref: (1, E)
    # o_ref: (1, S, E)      p_ref: (1, S, S)
    h = pl.program_id(1)

    @pl.when(h == 0)
    def _():
        out_sc[...] = jnp.zeros_like(out_sc)

    q = q_ref[0]
    k = k_ref[0]
    v = v_ref[0]

    s = lax.dot_general(
        q, k, (((1,), (1,)), ((), ())), preferred_element_type=jnp.float32
    )                                              # (S, S) f32, un-scaled
    m = jnp.max(s, axis=-1, keepdims=True)
    e = jnp.exp(s - m)
    denom = jnp.sum(e, axis=-1, keepdims=True)
    probs = e / denom                              # exact divide (materialized)
    p_ref[0] = probs.astype(p_ref.dtype)

    ctx = jnp.dot(probs.astype(v.dtype), v, preferred_element_type=jnp.float32)
    out_sc[...] += jnp.dot(
        ctx.astype(wo_ref.dtype), wo_ref[0], preferred_element_type=jnp.float32
    )

    @pl.when(h == pl.num_programs(1) - 1)
    def _():
        o_ref[0] = (out_sc[...] + b_ref[...].astype(jnp.float32)).astype(
            o_ref.dtype
        )


def _attention_outproj_with_probs(qkv_hm, wo_h, bo2, *, B, H, S, D):
    E = H * D
    itemsize = jnp.dtype(qkv_hm.dtype).itemsize
    cost = pl.CostEstimate(
        flops=4 * B * H * S * S * D + 2 * B * S * E * E,
        transcendentals=B * H * S * S,
        bytes_accessed=(4 * B * S * E + E * E + E + B * H * S * S) * itemsize,
    )

    out, probs = pl.pallas_call(
        _attn_probs_outproj_kernel,
        grid=(B, H),
        out_shape=(
            jax.ShapeDtypeStruct((B, S, E), qkv_hm.dtype),
            jax.ShapeDtypeStruct((B * H, S, S), qkv_hm.dtype),
        ),
        in_specs=[
            pl.BlockSpec((1, S, D), lambda b, h: (b * H + h, 0, 0)),
            pl.BlockSpec((1, S, D), lambda b, h: (B * H + b * H + h, 0, 0)),
            pl.BlockSpec((1, S, D), lambda b, h: (2 * B * H + b * H + h, 0, 0)),
            pl.BlockSpec((1, D, E), lambda b, h: (h, 0, 0)),
            pl.BlockSpec((1, E), lambda b, h: (0, 0)),
        ],
        out_specs=(
            pl.BlockSpec((1, S, E), lambda b, h: (b, 0, 0)),
            pl.BlockSpec((1, S, S), lambda b, h: (b * H + h, 0, 0)),
        ),
        scratch_shapes=[pltpu.VMEM((S, E), jnp.float32)],
        compiler_params=pltpu.CompilerParams(
            dimension_semantics=("parallel", "arbitrary"),
            vmem_limit_bytes=64 * _MB,
        ),
        cost_estimate=cost,
    )(qkv_hm, qkv_hm, qkv_hm, wo_h, bo2)
    return out, probs.reshape(B, H, S, S)


# -------------------------------- Module -----------------------------------

def init_params(key, embed_dim, dtype=jnp.float32):
    """QKV weights stored pre-fused as (E, 3E) (order q | k | v), weights are
    (in, out) so y = x @ W + b matches torch's nn.Linear y = x @ W_t^T + b."""
    keys = jax.random.split(key, 4)
    scale = 0.02
    w_qkv = (scale * jax.random.normal(keys[0], (embed_dim, 3 * embed_dim))).astype(dtype)
    b_qkv = (scale * jax.random.normal(keys[1], (3 * embed_dim,))).astype(dtype)
    wo = (scale * jax.random.normal(keys[2], (embed_dim, embed_dim))).astype(dtype)
    bo = (scale * jax.random.normal(keys[3], (embed_dim,))).astype(dtype)
    return {"w_qkv": w_qkv, "b_qkv": b_qkv, "wo": wo, "bo": bo}


@functools.partial(jax.jit, static_argnames=("num_heads", "output_attentions"))
def fact_bart_mha(hidden_states, params, *, num_heads, output_attentions=False):
    """Equivalent to FactBartMutilHeadAttention.forward(hidden_states) with
    key_value_states=past_key_value=attention_mask=layer_head_mask=None,
    dropout=0.0, is_decoder=False.  Pass bf16 hidden_states/params to use the
    bf16 MXU path (accumulation stays f32 inside the kernels)."""
    B, S, E = hidden_states.shape
    H = num_heads
    D = E // H

    # Fused QKV projection: one tiled matmul, one pass over x.
    qkv = linear(hidden_states.reshape(B * S, E), params["w_qkv"], params["b_qkv"])

    # Head-major relayout so attention blocks are lane-aligned (tile, D) slabs
    # (avoids in-kernel head slicing at non-128 lane offsets / XLU relayouts).
    qkv_hm = (
        qkv.reshape(B, S, 3, H, D)
        .transpose(2, 0, 3, 1, 4)
        .reshape(3 * B * H, S, D)
    )

    # out_proj (and back_shape) fused into the attention kernel: the context
    # activation never round-trips HBM.
    wo_h = params["wo"].reshape(H, D, E)
    bo2 = params["bo"].reshape(1, E)

    if output_attentions:
        out, probs = _attention_outproj_with_probs(
            qkv_hm, wo_h, bo2, B=B, H=H, S=S, D=D)
    else:
        out = _attention_outproj(qkv_hm, wo_h, bo2, B=B, H=H, S=S, D=D)
        probs = None
    return out, probs


# ------------------------------- Reference ----------------------------------

def _reference(hidden_states, params, num_heads):
    B, S, E = hidden_states.shape
    D = E // num_heads
    qkv = hidden_states @ params["w_qkv"] + params["b_qkv"]   # (B, S, 3E)

    def split(i):
        y = qkv[..., i * E:(i + 1) * E]
        return jnp.transpose(y.reshape(B, S, num_heads, D), (0, 2, 1, 3))

    q, k, v = split(0), split(1), split(2)
    scores = jnp.einsum("bhqd,bhkd->bhqk", q, k)              # no 1/sqrt(D)
    probs = jax.nn.softmax(scores, axis=-1)
    ctx = jnp.einsum("bhqk,bhkd->bhqd", probs, v)
    ctx = jnp.transpose(ctx, (0, 2, 1, 3)).reshape(B, S, E)
    out = ctx @ params["wo"] + params["bo"]
    return out, probs


if __name__ == "__main__":
    B, S, E, H = 2, 8, 32, 4

    key = jax.random.PRNGKey(0)
    k_x, k_p = jax.random.split(key)
    hidden_states = jax.random.normal(k_x, (B, S, E), dtype=jnp.float32)
    params = init_params(k_p, E)

    ref_out, ref_probs = _reference(hidden_states, params, H)

    # output_attentions=True path (probs materialized, exact softmax divide).
    out, probs = fact_bart_mha(
        hidden_states, params, num_heads=H, output_attentions=True
    )
    out = jax.block_until_ready(out)
    probs = jax.block_until_ready(probs)
    assert out.shape == (B, S, E)
    assert probs.shape == (B, H, S, S)
    assert jnp.allclose(out, ref_out, atol=2e-3, rtol=2e-3)
    assert jnp.allclose(probs, ref_probs, atol=2e-3, rtol=2e-3)

    # output_attentions=False path: flash loop, probs never materialized.
    out2, none_probs = fact_bart_mha(
        hidden_states, params, num_heads=H, output_attentions=False
    )
    out2 = jax.block_until_ready(out2)
    assert none_probs is None
    assert jnp.allclose(out2, ref_out, atol=2e-3, rtol=2e-3)

    # bf16 smoke test (bf16 MXU operands, f32 accumulation inside kernels).
    hs_bf16 = hidden_states.astype(jnp.bfloat16)
    params_bf16 = jax.tree_util.tree_map(
        lambda a: a.astype(jnp.bfloat16), params
    )
    out_bf16, _ = fact_bart_mha(
        hs_bf16, params_bf16, num_heads=H, output_attentions=False
    )
    out_bf16 = jax.block_until_ready(out_bf16)
    assert jnp.allclose(out_bf16.astype(jnp.float32), ref_out,
                        atol=5e-2, rtol=5e-2)

    print("KERNEL_OK")
</pallas_src>

<mosaic_0001>
module attributes {stable_mosaic.version = 11 : i64} {
  func.func @_linear_kernel(%arg0: i32, %arg1: i32, %arg2: memref<16x32xf32, #tpu.memory_space<vmem>>, %arg3: memref<32x96xf32, #tpu.memory_space<vmem>>, %arg4: memref<1x96xf32, #tpu.memory_space<vmem>>, %arg5: memref<16x96xf32, #tpu.memory_space<vmem>>) attributes {dimension_semantics = [#tpu.dimension_semantics<parallel>, #tpu.dimension_semantics<parallel>], iteration_bounds = array<i64: 1, 1>, scalar_prefetch = 0 : i64, scratch_operands = 0 : i64, tpu.core_type = #tpu.core_type<tc>, window_params = [{transform_indices = @transform_0, window_bounds = array<i64: 16, 32>}, {transform_indices = @transform_1, window_bounds = array<i64: 32, 96>}, {transform_indices = @transform_2, window_bounds = array<i64: 1, 96>}, {transform_indices = @transform_3, window_bounds = array<i64: 16, 96>}]} {
    %c0 = arith.constant 0 : index
    %c0_0 = arith.constant 0 : index
    %0 = vector.load %arg2[%c0, %c0_0] : memref<16x32xf32, #tpu.memory_space<vmem>>, vector<16x32xf32>
    %c0_1 = arith.constant 0 : index
    %c0_2 = arith.constant 0 : index
    %1 = vector.load %arg3[%c0_1, %c0_2] : memref<32x96xf32, #tpu.memory_space<vmem>>, vector<32x96xf32>
    %cst = arith.constant dense<0.000000e+00> : vector<16x96xf32>
    %2 = tpu.matmul %0, %1, %cst {dimension_numbers = #tpu.dot_dimension_numbers<[1], [0], [0], [1], [0, 0, 1, 1], [], []>} : vector<16x32xf32>, vector<32x96xf32>, vector<16x96xf32> -> vector<16x96xf32>
    %c0_3 = arith.constant 0 : index
    %c0_4 = arith.constant 0 : index
    %3 = vector.load %arg4[%c0_3, %c0_4] : memref<1x96xf32, #tpu.memory_space<vmem>>, vector<1x96xf32>
    %4 = vector.broadcast %3 : vector<1x96xf32> to vector<16x96xf32>
    %5 = arith.addf %2, %4 : vector<16x96xf32>
    %c0_5 = arith.constant 0 : index
    %c0_6 = arith.constant 0 : index
    %6 = vector.load %arg5[%c0_5, %c0_6] : memref<16x96xf32, #tpu.memory_space<vmem>>, vector<16x96xf32>
    tpu.vector_store %arg5[%c0_5, %c0_6], %5 {strides = array<i32>} : memref<16x96xf32, #tpu.memory_space<vmem>>, vector<16x96xf32>,
    return
  }
  func.func @transform_0(%arg0: i32, %arg1: i32) -> (i32, i32) {
    %c0_i32 = arith.constant 0 : i32
    %c0_i32_0 = arith.constant 0 : i32
    return %arg0, %c0_i32 : i32, i32
  }
  func.func @transform_1(%arg0: i32, %arg1: i32) -> (i32, i32) {
    %c0_i32 = arith.constant 0 : i32
    %c0_i32_0 = arith.constant 0 : i32
    return %c0_i32, %arg1 : i32, i32
  }
  func.func @transform_2(%arg0: i32, %arg1: i32) -> (i32, i32) {
    %c0_i32 = arith.constant 0 : i32
    %c0_i32_0 = arith.constant 0 : i32
    return %c0_i32, %arg1 : i32, i32
  }
  func.func @transform_3(%arg0: i32, %arg1: i32) -> (i32, i32) {
    %c0_i32 = arith.constant 0 : i32
    return %arg0, %arg1 : i32, i32
  }
}

module attributes {stable_mosaic.version = 11 : i64} {
  func.func @_attn_probs_outproj_kernel(%arg0: i32, %arg1: i32, %arg2: memref<1x8x8xf32, #tpu.memory_space<vmem>>, %arg3: memref<1x8x8xf32, #tpu.memory_space<vmem>>, %arg4: memref<1x8x8xf32, #tpu.memory_space<vmem>>, %arg5: memref<1x8x32xf32, #tpu.memory_space<vmem>>, %arg6: memref<1x32xf32, #tpu.memory_space<vmem>>, %arg7: memref<1x8x32xf32, #tpu.memory_space<vmem>>, %arg8: memref<1x8x8xf32, #tpu.memory_space<vmem>>, %arg9: memref<8x32xf32, #tpu.memory_space<vmem>>) attributes {dimension_semantics = [#tpu.dimension_semantics<parallel>, #tpu.dimension_semantics<arbitrary>], iteration_bounds = array<i64: 2, 4>, scalar_prefetch = 0 : i64, scratch_operands = 1 : i64, tpu.core_type = #tpu.core_type<tc>, window_params = [{transform_indices = @transform_0, window_bounds = array<i64: 1, 8, 8>}, {transform_indices = @transform_1, window_bounds = array<i64: 1, 8, 8>}, {transform_indices = @transform_2, window_bounds = array<i64: 1, 8, 8>}, {transform_indices = @transform_3, window_bounds = array<i64: 1, 8, 32>}, {pipeline_mode = #tpu.pipeline_mode<synchronous>, transform_indices = @transform_4, window_bounds = array<i64: 1, 32>}, {transform_indices = @transform_5, window_bounds = array<i64: 1, 8, 32>}, {transform_indices = @transform_6, window_bounds = array<i64: 1, 8, 8>}]} {
    %c0_i32 = arith.constant 0 : i32
    %0 = arith.cmpi eq, %arg1, %c0_i32 : i32
    %1 = arith.extui %0 : i1 to i32
    %c0_i32_0 = arith.constant 0 : i32
    %2 = arith.cmpi ne, %1, %c0_i32_0 : i32
    scf.if %2 {
      %cst_24 = arith.constant 0.000000e+00 : f32
      %32 = vector.broadcast %cst_24 : f32 to vector<8x32xf32>
      %c0_25 = arith.constant 0 : index
      %c0_26 = arith.constant 0 : index
      %33 = vector.load %arg9[%c0_25, %c0_26] : memref<8x32xf32, #tpu.memory_space<vmem>>, vector<8x32xf32>
      tpu.vector_store %arg9[%c0_25, %c0_26], %32 {strides = array<i32>} : memref<8x32xf32, #tpu.memory_space<vmem>>, vector<8x32xf32>,
    } else {
    }
    %c0 = arith.constant 0 : index
    %c0_1 = arith.constant 0 : index
    %c0_2 = arith.constant 0 : index
    %3 = vector.load %arg2[%c0, %c0_1, %c0_2] : memref<1x8x8xf32, #tpu.memory_space<vmem>>, vector<1x8x8xf32>
    %4 = vector.shape_cast %3 : vector<1x8x8xf32> to vector<8x8xf32>
    %c0_3 = arith.constant 0 : index
    %c0_4 = arith.constant 0 : index
    %c0_5 = arith.constant 0 : index
    %5 = vector.load %arg3[%c0_3, %c0_4, %c0_5] : memref<1x8x8xf32, #tpu.memory_space<vmem>>, vector<1x8x8xf32>
    %6 = vector.shape_cast %5 : vector<1x8x8xf32> to vector<8x8xf32>
    %c0_6 = arith.constant 0 : index
    %c0_7 = arith.constant 0 : index
    %c0_8 = arith.constant 0 : index
    %7 = vector.load %arg4[%c0_6, %c0_7, %c0_8] : memref<1x8x8xf32, #tpu.memory_space<vmem>>, vector<1x8x8xf32>
    %8 = vector.shape_cast %7 : vector<1x8x8xf32> to vector<8x8xf32>
    %cst = arith.constant dense<0.000000e+00> : vector<8x8xf32>
    %9 = tpu.matmul %4, %6, %cst {dimension_numbers = #tpu.dot_dimension_numbers<[1], [1], [0], [0], [0, 0, 1, 0], [], []>} : vector<8x8xf32>, vector<8x8xf32>, vector<8x8xf32> -> vector<8x8xf32>
    %cst_9 = arith.constant dense<0xFF800000> : vector<8xf32>
    %10 = vector.multi_reduction <maximumf>, %9, %cst_9 [1] : vector<8x8xf32> to vector<8xf32>
    %11 = vector.shape_cast %10 : vector<8xf32> to vector<8x1xf32>
    %12 = vector.broadcast %11 : vector<8x1xf32> to vector<8x8xf32>
    %13 = arith.subf %9, %12 : vector<8x8xf32>
    %14 = math.exp %13 : vector<8x8xf32>
    %cst_10 = arith.constant dense<0.000000e+00> : vector<8xf32>
    %15 = vector.multi_reduction <add>, %14, %cst_10 [1] : vector<8x8xf32> to vector<8xf32>
    %16 = vector.shape_cast %15 : vector<8xf32> to vector<8x1xf32>
    %17 = vector.broadcast %16 : vector<8x1xf32> to vector<8x8xf32>
    %18 = arith.divf %14, %17 : vector<8x8xf32>
    %c0_11 = arith.constant 0 : index
    %c0_12 = arith.constant 0 : index
    %c0_13 = arith.constant 0 : index
    %19 = vector.load %arg8[%c0_11, %c0_12, %c0_13] : memref<1x8x8xf32, #tpu.memory_space<vmem>>, vector<1x8x8xf32>
    %20 = vector.shape_cast %19 : vector<1x8x8xf32> to vector<8x8xf32>
    %21 = vector.shape_cast %18 : vector<8x8xf32> to vector<1x8x8xf32>
    tpu.vector_store %arg8[%c0_11, %c0_12, %c0_13], %21 {strides = array<i32>} : memref<1x8x8xf32, #tpu.memory_space<vmem>>, vector<1x8x8xf32>,
    %cst_14 = arith.constant dense<0.000000e+00> : vector<8x8xf32>
    %22 = tpu.matmul %18, %8, %cst_14 {dimension_numbers = #tpu.dot_dimension_numbers<[1], [0], [0], [1], [0, 0, 1, 1], [], []>} : vector<8x8xf32>, vector<8x8xf32>, vector<8x8xf32> -> vector<8x8xf32>
    %c0_15 = arith.constant 0 : index
    %c0_16 = arith.constant 0 : index
    %23 = vector.load %arg9[%c0_15, %c0_16] : memref<8x32xf32, #tpu.memory_space<vmem>>, vector<8x32xf32>
    %c0_17 = arith.constant 0 : index
    %c0_18 = arith.constant 0 : index
    %c0_19 = arith.constant 0 : index
    %24 = vector.load %arg5[%c0_17, %c0_18, %c0_19] : memref<1x8x32xf32, #tpu.memory_space<vmem>>, vector<1x8x32xf32>
    %25 = vector.shape_cast %24 : vector<1x8x32xf32> to vector<8x32xf32>
    %cst_20 = arith.constant dense<0.000000e+00> : vector<8x32xf32>
    %26 = tpu.matmul %22, %25, %cst_20 {dimension_numbers = #tpu.dot_dimension_numbers<[1], [0], [0], [1], [0, 0, 1, 1], [], []>} : vector<8x8xf32>, vector<8x32xf32>, vector<8x32xf32> -> vector<8x32xf32>
    %27 = arith.addf %23, %26 : vector<8x32xf32>
    %c0_21 = arith.constant 0 : index
    %c0_22 = arith.constant 0 : index
    %28 = vector.load %arg9[%c0_21, %c0_22] : memref<8x32xf32, #tpu.memory_space<vmem>>, vector<8x32xf32>
    tpu.vector_store %arg9[%c0_21, %c0_22], %27 {strides = array<i32>} : memref<8x32xf32, #tpu.memory_space<vmem>>, vector<8x32xf32>,
    %c3_i32 = arith.constant 3 : i32
    %29 = arith.cmpi eq, %arg1, %c3_i32 : i32
    %30 = arith.extui %29 : i1 to i32
    %c0_i32_23 = arith.constant 0 : i32
    %31 = arith.cmpi ne, %30, %c0_i32_23 : i32
    scf.if %31 {
      %c0_24 = arith.constant 0 : index
      %c0_25 = arith.constant 0 : index
      %32 = vector.load %arg9[%c0_24, %c0_25] : memref<8x32xf32, #tpu.memory_space<vmem>>, vector<8x32xf32>
      %c0_26 = arith.constant 0 : index
      %c0_27 = arith.constant 0 : index
      %33 = vector.load %arg6[%c0_26, %c0_27] : memref<1x32xf32, #tpu.memory_space<vmem>>, vector<1x32xf32>
      %34 = vector.broadcast %33 : vector<1x32xf32> to vector<8x32xf32>
      %35 = arith.addf %32, %34 : vector<8x32xf32>
      %c0_28 = arith.constant 0 : index
      %c0_29 = arith.constant 0 : index
      %c0_30 = arith.constant 0 : index
      %36 = vector.load %arg7[%c0_28, %c0_29, %c0_30] : memref<1x8x32xf32, #tpu.memory_space<vmem>>, vector<1x8x32xf32>
      %37 = vector.shape_cast %36 : vector<1x8x32xf32> to vector<8x32xf32>
      %38 = vector.shape_cast %35 : vector<8x32xf32> to vector<1x8x32xf32>
      tpu.vector_store %arg7[%c0_28, %c0_29, %c0_30], %38 {strides = array<i32>} : memref<1x8x32xf32, #tpu.memory_space<vmem>>, vector<1x8x32xf32>,
    } else {
    }
    return
  }
  func.func @transform_0(%arg0: i32, %arg1: i32) -> (i32, i32, i32) {
    %c4_i32 = arith.constant 4 : i32
    %0 = arith.muli %arg0, %c4_i32 : i32
    %1 = arith.addi %0, %arg1 : i32
    %c0_i32 = arith.constant 0 : i32
    %c0_i32_0 = arith.constant 0 : i32
    %c0_i32_1 = arith.constant 0 : i32
    return %1, %c0_i32, %c0_i32_0 : i32, i32, i32
  }
  func.func @transform_1(%arg0: i32, %arg1: i32) -> (i32, i32, i32) {
    %c4_i32 = arith.constant 4 : i32
    %0 = arith.muli %arg0, %c4_i32 : i32
    %c8_i32 = arith.constant 8 : i32
    %1 = arith.addi %c8_i32, %0 : i32
    %2 = arith.addi %1, %arg1 : i32
    %c0_i32 = arith.constant 0 : i32
    %c0_i32_0 = arith.constant 0 : i32
    %c0_i32_1 = arith.constant 0 : i32
    return %2, %c0_i32, %c0_i32_0 : i32, i32, i32
  }
  func.func @transform_2(%arg0: i32, %arg1: i32) -> (i32, i32, i32) {
    %c4_i32 = arith.constant 4 : i32
    %0 = arith.muli %arg0, %c4_i32 : i32
    %c16_i32 = arith.constant 16 : i32
    %1 = arith.addi %c16_i32, %0 : i32
    %2 = arith.addi %1, %arg1 : i32
    %c0_i32 = arith.constant 0 : i32
    %c0_i32_0 = arith.constant 0 : i32
    %c0_i32_1 = arith.constant 0 : i32
    return %2, %c0_i32, %c0_i32_0 : i32, i32, i32
  }
  func.func @transform_3(%arg0: i32, %arg1: i32) -> (i32, i32, i32) {
    %c0_i32 = arith.constant 0 : i32
    %c0_i32_0 = arith.constant 0 : i32
    %c0_i32_1 = arith.constant 0 : i32
    return %arg1, %c0_i32, %c0_i32_0 : i32, i32, i32
  }
  func.func @transform_4(%arg0: i32, %arg1: i32) -> (i32, i32) {
    %c0_i32 = arith.constant 0 : i32
    %c0_i32_0 = arith.constant 0 : i32
    %c0_i32_1 = arith.constant 0 : i32
    return %c0_i32, %c0_i32_0 : i32, i32
  }
  func.func @transform_5(%arg0: i32, %arg1: i32) -> (i32, i32, i32) {
    %c0_i32 = arith.constant 0 : i32
    %c0_i32_0 = arith.constant 0 : i32
    %c0_i32_1 = arith.constant 0 : i32
    return %arg0, %c0_i32, %c0_i32_0 : i32, i32, i32
  }
  func.func @transform_6(%arg0: i32, %arg1: i32) -> (i32, i32, i32) {
    %c4_i32 = arith.constant 4 : i32
    %0 = arith.muli %arg0, %c4_i32 : i32
    %1 = arith.addi %0, %arg1 : i32
    %c0_i32 = arith.constant 0 : i32
    %c0_i32_0 = arith.constant 0 : i32
    %c0_i32_1 = arith.constant 0 : i32
    return %1, %c0_i32, %c0_i32_0 : i32, i32, i32
  }
}

</mosaic_0001>

<llo_original>
// kernel: fact_bart_mha.2
$region0: #{fact_bart_mha.2}
  #allocation0 [shape = 'u32[]', space=smem, size = 0x4, offset = 0x4, fixed_abs, tag = 'smem constant byte address 0x4 - core index']
  #allocation1 [shape = 'u32[144,128]{1,0:T(1,128)}', space=vmem, size = 0x12000, scoped, tag = 'internal scratch']
  %s0 = inlined_call_operand.hbm [shape: f32[16,32], index: 0, kind: input, shape index: {}]
  %s1 = inlined_call_operand.hbm [shape: f32[32,96], index: 1, kind: input, shape index: {}]
  %s2 = inlined_call_operand.vmem [shape: f32[1,96], index: 2, kind: input, shape index: {}]
  %s3 = inlined_call_operand.vmem [shape: f32[16,96], index: 3, kind: output, shape index: {}]
  %s4 = sld [smem:[#allocation0]]
  $region30: #{fact_bart_mha.2} parent=0
    _
  %s6 = ssub.s32 1, %s4
  %s7 = scalar_select 0, %s6, %s4
  $region1: #{fact_bart_mha.2} parent=0
    #allocation2 [shape = 'u8[8192]{0}', space=vmem, size = 0x2000, scoped, tag = 'input window, operand 0, single buffered']
    #allocation3 [shape = 's32[1]{0}', space=sflag, size = 0x4, scoped, tag = 'scoped memory for fact_bart_mha.2']
    #allocation4 [shape = 'u8[16384]{0}', space=vmem, size = 0x4000, scoped, tag = 'input window, operand 1, single buffered']
    #allocation5 [shape = 's32[1]{0}', space=sflag, size = 0x4, scoped, tag = 'scoped memory for fact_bart_mha.2']
    %8 = vsyncpa [#allocation3], 0
    %9 = vsyncpa [#allocation5], 0
    // Predicated region
    $region2: #{fact_bart_mha.2} parent=1 // pred_check
      _
    $region3: #{fact_bart_mha.2} parent=1 // pred_check_branch
      %11 = sbr.rel (0) target = $region5
    $region4: #{fact_bart_mha.2} parent=1 // pred_region
      %s13 = ssub.s32 256, 256
      %14 = vsyncadd [#allocation3], %s13
      %s15 = sshll.u32 [#allocation2], 4
      %s16 = int_to_ptr.vmem [resolvable:$true] %s15
      %21 = dma.hbm_to_vmem [thread:$0]  %s0, 256, %s16, [#allocation3], 128, 128, 8
    $region5: #{fact_bart_mha.2} parent=1 // pred_fallthru
      _
    // Predicated region
    $region6: #{fact_bart_mha.2} parent=1 // pred_check
      _
    $region7: #{fact_bart_mha.2} parent=1 // pred_check_branch
      %23 = sbr.rel (0) target = $region9
    $region8: #{fact_bart_mha.2} parent=1 // pred_region
      %s25 = ssub.s32 512, 512
      %26 = vsyncadd [#allocation5], %s25
      %s27 = sshll.u32 [#allocation4], 4
      %s28 = int_to_ptr.vmem [resolvable:$true] %s27
      %33 = dma.hbm_to_vmem [thread:$0]  %s1, 512, %s28, [#allocation5], 128, 128, 8
    $region9: #{fact_bart_mha.2} parent=1 // pred_fallthru
      _
    // Predicated region
    $region10: #{fact_bart_mha.2} parent=1 // pred_check
      _
    $region11: #{fact_bart_mha.2} parent=1 // pred_check_branch
      %35 = sbr.rel (0) target = $region13
    $region12: #{fact_bart_mha.2} parent=1 // pred_region
      _
    $region13: #{fact_bart_mha.2} parent=1 // pred_fallthru
      _
    // Predicated region
    $region14: #{fact_bart_mha.2} parent=1 // pred_check
      _
    $region15: #{fact_bart_mha.2} parent=1 // pred_check_branch
      %37 = sbr.rel (0) target = $region17
    $region16: #{fact_bart_mha.2} parent=1 // pred_region
      %38 = dma.done [#allocation3], 256
    $region17: #{fact_bart_mha.2} parent=1 // pred_fallthru
      _
    // Predicated region
    $region18: #{fact_bart_mha.2} parent=1 // pred_check
      _
    $region19: #{fact_bart_mha.2} parent=1 // pred_check_branch
      %40 = sbr.rel (0) target = $region21
    $region20: #{fact_bart_mha.2} parent=1 // pred_region
      %41 = dma.done [#allocation5], 512
    $region21: #{fact_bart_mha.2} parent=1 // pred_fallthru
      _
    %v42 = vld [vmem:[#allocation2] sm:$0xff]
    %v43 = vld [vmem:[#allocation2 + $0x8] sm:$0xff]
    %v44 = vld [vmem:[#allocation4] sm:$0xff]
    %v45 = vld [vmem:[#allocation4 + $0x8] sm:$0xff]
    %v46 = vld [vmem:[#allocation4 + $0x10] sm:$0xff]
    %v47 = vld [vmem:[#allocation4 + $0x18] sm:$0xff]
    %v48 = vld [vmem:[%s2] sm:$0x1]
    %v50 = vlaneseq
    %v51 = vshrl.u32 %v50, 7
    %v52 = vsub.s32 0, %v51
    %v53 = vrot.slane %v48, %v52
    %vm55 = vcmask 261120
    %v57 = vsel %vm55, %v42, 0
    %v60 = vsel %vm55, %v43, 0
    %62 = vmatprep.subr.mxu0 0.0
    %63 = vmatpush1.msra.mxu0 0.0
    %64 = vmatprep.subr.mxu0 0.0
    %65 = vmatpush1.msra.mxu0 0.0
    %66 = vmatprep.subr.mxu0 0.0
    %67 = vmatpush1.msra.mxu0 0.0
    %68 = vmatprep.subr.mxu0 0.0
    %69 = vmatpush1.msra.mxu0 0.0
    %70 = vmatprep.subr.mxu0 0.0
    %71 = vmatpush1.msra.mxu0 0.0
    %72 = vmatprep.subr.mxu0 0.0
    %73 = vmatpush1.msra.mxu0 0.0
    %74 = vmatprep.subr.mxu0 0.0
    %75 = vmatpush1.msra.mxu0 0.0
    %76 = vmatprep.subr.mxu0 0.0
    %77 = vmatpush1.msra.mxu0 0.0
    %78 = vmatprep.subr.mxu0 0.0
    %79 = vmatpush1.msra.mxu0 0.0
    %80 = vmatprep.subr.mxu0 0.0
    %81 = vmatpush1.msra.mxu0 0.0
    %82 = vmatprep.subr.mxu0 0.0
    %83 = vmatpush1.msra.mxu0 0.0
    %84 = vmatprep.subr.mxu0 0.0
    %85 = vmatpush1.msra.mxu0 0.0
    %86 = vmatprep.subr.mxu0 0.0
    %87 = vmatpush1.msra.mxu0 %v47
    %88 = vmatprep.subr.mxu0 0.0
    %89 = vmatpush1.msra.mxu0 %v46
    %90 = vmatprep.subr.mxu0 0.0
    %91 = vmatpush1.msra.mxu0 %v45
    %92 = vmatprep.subr.mxu0 0.0
    %93 = vmatpush1.msra.mxu0 %v44
    %94 = vmatprep.subr.mxu0 0.0
    %95 = vmatpush2.msra.mxu0 0.0
    %96 = vmatprep.subr.mxu0 0.0
    %97 = vmatpush2.msra.mxu0 0.0
    %98 = vmatprep.subr.mxu0 0.0
    %99 = vmatpush2.msra.mxu0 0.0
    %100 = vmatprep.subr.mxu0 0.0
    %101 = vmatpush2.msra.mxu0 0.0
    %102 = vmatprep.subr.mxu0 0.0
    %103 = vmatpush2.msra.mxu0 0.0
    %104 = vmatprep.subr.mxu0 0.0
    %105 = vmatpush2.msra.mxu0 0.0
    %106 = vmatprep.subr.mxu0 0.0
    %107 = vmatpush2.msra.mxu0 0.0
    %108 = vmatprep.subr.mxu0 0.0
    %109 = vmatpush2.msra.mxu0 0.0
    %110 = vmatprep.subr.mxu0 0.0
    %111 = vmatpush2.msra.mxu0 0.0
    %112 = vmatprep.subr.mxu0 0.0
    %113 = vmatpush2.msra.mxu0 0.0
    %114 = vmatprep.subr.mxu0 0.0
    %115 = vmatpush2.msra.mxu0 0.0
    %116 = vmatprep.subr.mxu0 0.0
    %117 = vmatpush2.msra.mxu0 0.0
    %118 = vmatprep.subr.mxu0 0.0
    %119 = vmatpush2.msra.mxu0 0.0
    %120 = vmatprep.subr.mxu0 0.0
    %121 = vmatpush2.msra.mxu0 0.0
    %122 = vmatprep.subr.mxu0 0.0
    %123 = vmatpush2.msra.mxu0 0.0
    %124 = vmatprep.subr.mxu0 0.0
    %125 = vmatpush2.msra.mxu0 0.0
    %126 = vmatprep.mubr.f32.mxu0 0.0
    %127 = vmatmul.mubr.f32.gmra.mxu0 %v57
    %v128 = vpop.f32.mrf.mxu0
    %v129 = vadd.f32 %v53, %v128
    %v130 = vpop.f32.mrf.mxu0
    %131 = vmatprep.mubr.f32.mxu0 0.0
    %132 = vmatmul.mubr.f32.gmra.mxu0 %v60
    %v133 = vpop.f32.mrf.mxu0
    %v134 = vadd.f32 %v53, %v133
    %v135 = vpop.f32.mrf.mxu0
    %136 = vdwg.mxu0
    %vm137 = vcmask 785408
    %138 = vst.msk [vmem:[%s3] sm:$0xff] %vm137, %v129
    %139 = vst.msk [vmem:[%s3 + $0x8] sm:$0xff] %vm137, %v134
    // Predicated region
    $region22: #{fact_bart_mha.2} parent=1 // pred_check
      _
    $region23: #{fact_bart_mha.2} parent=1 // pred_check_branch
      %141 = sbr.rel (0) target = $region25
    $region24: #{fact_bart_mha.2} parent=1 // pred_region
      _
    $region25: #{fact_bart_mha.2} parent=1 // pred_fallthru
      _
    // Predicated region
    $region26: #{fact_bart_mha.2} parent=1 // pred_check
      _
    $region27: #{fact_bart_mha.2} parent=1 // pred_check_branch
      %143 = sbr.rel (0) target = $region29
    $region28: #{fact_bart_mha.2} parent=1 // pred_region
      _
    $region29: #{fact_bart_mha.2} parent=1 // pred_fallthru
      _
    %144 = vsyncpa [#allocation3], 1
    %145 = vsyncpa [#allocation5], 1

// kernel: fact_bart_mha.3
$region0: #{fact_bart_mha.3}
  #allocation0 [shape = 'u32[]', space=smem, size = 0x4, offset = 0x4, fixed_abs, tag = 'smem constant byte address 0x4 - core index']
  #allocation1 [shape = 'u32[144,128]{1,0:T(1,128)}', space=vmem, size = 0x12000, scoped, tag = 'internal scratch']
  #allocation2 [shape = 'f32[8,32]{1,0:T(8,128)}', space=vmem, size = 0x1000, scoped, tag = 'scratch operand']
  %s0 = inlined_call_operand.vmem [shape: f32[24,8,8], index: 0, kind: input, shape index: {}, may-alias: {0,1,2}]
  %s1 = inlined_call_operand.vmem [shape: f32[24,8,8], index: 1, kind: input, shape index: {}, may-alias: {0,1,2}]
  %s2 = inlined_call_operand.vmem [shape: f32[24,8,8], index: 2, kind: input, shape index: {}, may-alias: {0,1,2}]
  %s3 = inlined_call_operand.vmem [shape: f32[4,8,32], index: 3, kind: input, shape index: {}]
  %s4 = inlined_call_operand.vmem [shape: f32[1,32], index: 4, kind: input, shape index: {}]
  %s5 = inlined_call_operand.hbm [shape: f32[2,8,32], index: 5, kind: output, shape index: {0}]
  %s6 = inlined_call_operand.hbm [shape: f32[8,8,8], index: 6, kind: output, shape index: {1}]
  %7 = xla_tuple %s5, %s6
  %s8 = sld [smem:[#allocation0]]
  $region69: #{fact_bart_mha.3} parent=0
    _
  %s10 = ssub.s32 1, %s8
  %s11 = scalar_select 0, %s10, %s8
  $region1: #{fact_bart_mha.3} parent=0
    #allocation3 [shape = 'u8[8192]{0}', space=vmem, size = 0x2000, scoped, tag = 'output window, operand 0']
    #allocation4 [shape = 's32[2]{0}', space=sflag, size = 0x8, scoped, tag = 'scoped memory for fact_bart_mha.3']
    #allocation5 [shape = 'u8[8192]{0}', space=vmem, size = 0x2000, scoped, tag = 'output window, operand 1']
    #allocation6 [shape = 's32[2]{0}', space=sflag, size = 0x8, scoped, tag = 'scoped memory for fact_bart_mha.3']
    %12 = vsyncpa [#allocation4], 0
    %s13 = scalar_lea.sflag [#allocation4], 1
    %14 = vsyncpa %s13, 0
    %15 = vsyncpa [#allocation6], 0
    %s16 = scalar_lea.sflag [#allocation6], 1
    %17 = vsyncpa %s16, 0
    loop: start=0, step=1, limit=10
    $region2: #{fact_bart_mha.3} parent=1 // loop_pre_header
      _
    $region3: #{fact_bart_mha.3} parent=1 // loop_header
      %s19 = sphi 0, %s23
      %p20 = scmp.ge.s32.totalorder %s19, 10
      %s26 = sphi 0, %s38
      %s27 = sphi 0, %s34
      %s28 = sphi 0, %s26
      %s29 = sphi 0, %s27
      %s30 = sphi 0, %s28
      %s31 = sphi 0, %s29
      %s45 = sphi 0, %s47
      %s48 = sphi 0, %s45
      %s49 = sphi 0, %s48
      %s65 = sphi 0, %s49
      %s77 = sphi 0, %s79
      %s80 = sphi 0, %s77
      %s81 = sphi 0, %s80
      %s97 = sphi 0, %s81
      %s109 = sphi 0, %s111
      %s112 = sphi 0, %s109
      %s113 = sphi 0, %s112
      %s129 = sphi 0, %s113
      %s135 = sphi 0, %s137
      %s138 = sphi 0, %s135
      %s139 = sphi 0, %s138
      %s155 = sphi 0, %s139
      %s159 = sphi 0, %s159
      %s161 = sphi 0, %s159
      %s162 = sphi 0, %s161
      %s176 = sphi 0, %s162
      %s182 = sphi 0, %s184
      %s185 = sphi 0, %s182
      %s186 = sphi 0, %s185
      %s202 = sphi 0, %s186
      %s212 = sphi 0, %s214
      %s215 = sphi 0, %s212
      %s216 = sphi 0, %s215
      %s232 = sphi 0, %s216
    $region4: #{fact_bart_mha.3} parent=1 // loop_header_branch
      %22 = sbr.rel (%p20) target = $region8
    $region5: #{fact_bart_mha.3} parent=1 // loop_body
      %s24 = ssub.s32 %s19, 1
      %s25 = ssub.s32 %s19, 2
      %s32 = sadd.s32 1, %s27
      %p33 = scmp.ge.s32.totalorder %s32, 4
      %s34 = scalar_select %p33, 0, %s32
      %s35 = sadd.s32 1, %s26
      %s36 = scalar_select %p33, %s35, %s26
      %p37 = scmp.ge.s32.totalorder %s36, 2
      %s38 = scalar_select %p37, 0, %s36
      %s39 = smul.u32 %s26, 4
      %s40 = sadd.s32 %s39, %s27
      %s41 = smul.u32 %s38, 4
      %s42 = sadd.s32 %s41, %s34
      %s43 = ssub.s32 %s40, %s42
      %p44 = scmp.eq.s32.totalorder %s43, 0
      %s46 = sadd.s32 %s45, 1
      %s47 = scalar_select %p44, %s45, %s46
      %p50 = pneg %p44
      %p51 = scmp.eq.s32.totalorder %s19, 7
      %p52 = por %p50, %p51
      %p53 = scmp.ne.s32.totalorder %s45, %s48
      %p54 = scmp.eq.s32.totalorder %s19, 0
      %p55 = por %p53, %p54
      %p56 = scmp.ne.s32.totalorder %s45, %s48
      %p57 = scmp.eq.s32.totalorder %s24, 7
      %p58 = por %p56, %p57
      %p59 = scmp.ne.s32.totalorder %s48, %s49
      %p60 = scmp.eq.s32.totalorder %s24, 0
      %p61 = por %p59, %p60
      %p62 = scmp.ne.s32.totalorder %s48, %s49
      %p63 = scmp.eq.s32.totalorder %s25, 7
      %p64 = por %p62, %p63
      %p66 = scmp.ne.s32.totalorder %s49, %s65
      %p67 = scmp.eq.s32.totalorder %s25, 0
      %p68 = por %p66, %p67
      %s69 = smul.u32 %s26, 4
      %s70 = sadd.s32 %s69, 8
      %s71 = sadd.s32 %s70, %s27
      %s72 = smul.u32 %s38, 4
      %s73 = sadd.s32 %s72, 8
      %s74 = sadd.s32 %s73, %s34
      %s75 = ssub.s32 %s71, %s74
      %p76 = scmp.eq.s32.totalorder %s75, 0
      %s78 = sadd.s32 %s77, 1
      %s79 = scalar_select %p76, %s77, %s78
      %p82 = pneg %p76
      %p83 = scmp.eq.s32.totalorder %s19, 7
      %p84 = por %p82, %p83
      %p85 = scmp.ne.s32.totalorder %s77, %s80
      %p86 = scmp.eq.s32.totalorder %s19, 0
      %p87 = por %p85, %p86
      %p88 = scmp.ne.s32.totalorder %s77, %s80
      %p89 = scmp.eq.s32.totalorder %s24, 7
      %p90 = por %p88, %p89
      %p91 = scmp.ne.s32.totalorder %s80, %s81
      %p92 = scmp.eq.s32.totalorder %s24, 0
      %p93 = por %p91, %p92
      %p94 = scmp.ne.s32.totalorder %s80, %s81
      %p95 = scmp.eq.s32.totalorder %s25, 7
      %p96 = por %p94, %p95
      %p98 = scmp.ne.s32.totalorder %s81, %s97
      %p99 = scmp.eq.s32.totalorder %s25, 0
      %p100 = por %p98, %p99
      %s101 = smul.u32 %s26, 4
      %s102 = sadd.s32 %s101, 16
      %s103 = sadd.s32 %s102, %s27
      %s104 = smul.u32 %s38, 4
      %s105 = sadd.s32 %s104, 16
      %s106 = sadd.s32 %s105, %s34
      %s107 = ssub.s32 %s103, %s106
      %p108 = scmp.eq.s32.totalorder %s107, 0
      %s110 = sadd.s32 %s109, 1
      %s111 = scalar_select %p108, %s109, %s110
      %p114 = pneg %p108
      %p115 = scmp.eq.s32.totalorder %s19, 7
      %p116 = por %p114, %p115
      %p117 = scmp.ne.s32.totalorder %s109, %s112
      %p118 = scmp.eq.s32.totalorder %s19, 0
      %p119 = por %p117, %p118
      %p120 = scmp.ne.s32.totalorder %s109, %s112
      %p121 = scmp.eq.s32.totalorder %s24, 7
      %p122 = por %p120, %p121
      %p123 = scmp.ne.s32.totalorder %s112, %s113
      %p124 = scmp.eq.s32.totalorder %s24, 0
      %p125 = por %p123, %p124
      %p126 = scmp.ne.s32.totalorder %s112, %s113
      %p127 = scmp.eq.s32.totalorder %s25, 7
      %p128 = por %p126, %p127
      %p130 = scmp.ne.s32.totalorder %s113, %s129
      %p131 = scmp.eq.s32.totalorder %s25, 0
      %p132 = por %p130, %p131
      %s133 = ssub.s32 %s27, %s34
      %p134 = scmp.eq.s32.totalorder %s133, 0
      %s136 = sadd.s32 %s135, 1
      %s137 = scalar_select %p134, %s135, %s136
      %p140 = pneg %p134
      %p141 = scmp.eq.s32.totalorder %s19, 7
      %p142 = por %p140, %p141
      %p143 = scmp.ne.s32.totalorder %s135, %s138
      %p144 = scmp.eq.s32.totalorder %s19, 0
      %p145 = por %p143, %p144
      %p146 = scmp.ne.s32.totalorder %s135, %s138
      %p147 = scmp.eq.s32.totalorder %s24, 7
      %p148 = por %p146, %p147
      %p149 = scmp.ne.s32.totalorder %s138, %s139
      %p150 = scmp.eq.s32.totalorder %s24, 0
      %p151 = por %p149, %p150
      %p152 = scmp.ne.s32.totalorder %s138, %s139
      %p153 = scmp.eq.s32.totalorder %s25, 7
      %p154 = por %p152, %p153
      %p156 = scmp.ne.s32.totalorder %s139, %s155
      %p157 = scmp.eq.s32.totalorder %s25, 0
      %p158 = por %p156, %p157
      %s160 = sadd.s32 %s159, 1
      %p163 = scmp.eq.s32.totalorder %s19, 7
      %p164 = scmp.ne.s32.totalorder %s159, %s161
      %p165 = scmp.eq.s32.totalorder %s19, 0
      %p166 = por %p164, %p165
      %p167 = scmp.ne.s32.totalorder %s159, %s161
      %p168 = scmp.eq.s32.totalorder %s24, 7
      %p169 = por %p167, %p168
      %p170 = scmp.ne.s32.totalorder %s161, %s162
      %p171 = scmp.eq.s32.totalorder %s24, 0
      %p172 = por %p170, %p171
      %p173 = scmp.ne.s32.totalorder %s161, %s162
      %p174 = scmp.eq.s32.totalorder %s25, 7
      %p175 = por %p173, %p174
      %p177 = scmp.ne.s32.totalorder %s162, %s176
      %p178 = scmp.eq.s32.totalorder %s25, 0
      %p179 = por %p177, %p178
      %s180 = ssub.s32 %s26, %s38
      %p181 = scmp.eq.s32.totalorder %s180, 0
      %s183 = sadd.s32 %s182, 1
      %s184 = scalar_select %p181, %s182, %s183
      %p187 = pneg %p181
      %p188 = scmp.eq.s32.totalorder %s19, 7
      %p189 = por %p187, %p188
      %p190 = scmp.ne.s32.totalorder %s182, %s185
      %p191 = scmp.eq.s32.totalorder %s19, 0
      %p192 = por %p190, %p191
      %p193 = scmp.ne.s32.totalorder %s182, %s185
      %p194 = scmp.eq.s32.totalorder %s24, 7
      %p195 = por %p193, %p194
      %p196 = scmp.ne.s32.totalorder %s185, %s186
      %p197 = scmp.eq.s32.totalorder %s24, 0
      %p198 = por %p196, %p197
      %p199 = scmp.ne.s32.totalorder %s185, %s186
      %p200 = scmp.eq.s32.totalorder %s25, 7
      %p201 = por %p199, %p200
      %p203 = scmp.ne.s32.totalorder %s186, %s202
      %p204 = scmp.eq.s32.totalorder %s25, 0
      %p205 = por %p203, %p204
      %s206 = smul.u32 %s26, 4
      %s207 = sadd.s32 %s206, %s27
      %s208 = smul.u32 %s38, 4
      %s209 = sadd.s32 %s208, %s34
      %s210 = ssub.s32 %s207, %s209
      %p211 = scmp.eq.s32.totalorder %s210, 0
      %s213 = sadd.s32 %s212, 1
      %s214 = scalar_select %p211, %s212, %s213
      %p217 = pneg %p211
      %p218 = scmp.eq.s32.totalorder %s19, 7
      %p219 = por %p217, %p218
      %p220 = scmp.ne.s32.totalorder %s212, %s215
      %p221 = scmp.eq.s32.totalorder %s19, 0
      %p222 = por %p220, %p221
      %p223 = scmp.ne.s32.totalorder %s212, %s215
      %p224 = scmp.eq.s32.totalorder %s24, 7
      %p225 = por %p223, %p224
      %p226 = scmp.ne.s32.totalorder %s215, %s216
      %p227 = scmp.eq.s32.totalorder %s24, 0
      %p228 = por %p226, %p227
      %p229 = scmp.ne.s32.totalorder %s215, %s216
      %p230 = scmp.eq.s32.totalorder %s25, 7
      %p231 = por %p229, %p230
      %p233 = scmp.ne.s32.totalorder %s216, %s232
      %p234 = scmp.eq.s32.totalorder %s25, 0
      %p235 = por %p233, %p234
      %p236 = scmp.le.s32.totalorder 1, %s19
      %p237 = scmp.lt.s32.totalorder %s19, 9
      %p238 = pnand %p236, %p237
      %p239 = pneg %p238
      // Predicated region
      $region9: #{fact_bart_mha.3} parent=5 // pred_check
        _
      $region10: #{fact_bart_mha.3} parent=5 // pred_check_branch
        %241 = sbr.rel (%p238) target = $region12
      $region11: #{fact_bart_mha.3} parent=5 // pred_region
        %s242 = ssub.s32 %s19, 1
        // Predicated region
        $region13: #{fact_bart_mha.3} parent=11 // pred_check
          %p243 = pneg %p172
        $region14: #{fact_bart_mha.3} parent=11 // pred_check_branch
          %245 = sbr.rel (%p243) target = $region16
        $region15: #{fact_bart_mha.3} parent=11 // pred_region
          _
        $region16: #{fact_bart_mha.3} parent=11 // pred_fallthru
          _
      $region12: #{fact_bart_mha.3} parent=5 // pred_fallthru
        _
      %p246 = scmp.lt.s32.totalorder %s19, 8
      // Predicated region
      $region17: #{fact_bart_mha.3} parent=5 // pred_check
        %p247 = pneg %p246
      $region18: #{fact_bart_mha.3} parent=5 // pred_check_branch
        %249 = sbr.rel (%p247) target = $region20
      $region19: #{fact_bart_mha.3} parent=5 // pred_region
        // Predicated region
        $region21: #{fact_bart_mha.3} parent=19 // pred_check
          %p250 = pneg %p55
        $region22: #{fact_bart_mha.3} parent=19 // pred_check_branch
          %252 = sbr.rel (%p250) target = $region24
        $region23: #{fact_bart_mha.3} parent=19 // pred_region
          %s253 = smul.u32 %s26, 4
          %s254 = sadd.s32 %s253, %s27
          %p255 = scmp.lt.s32.totalorder %s254, 23
          %s256 = scalar_select %p255, %s254, 23
          %s257 = smul.addr %s256, 8
          %s258 = scalar_lea.vmem %s0, %s257
          %s259 = smul.u32 %s26, 4
          %s260 = sadd.s32 %s259, %s27
        $region24: #{fact_bart_mha.3} parent=19 // pred_fallthru
          _
        // Predicated region
        $region25: #{fact_bart_mha.3} parent=19 // pred_check
          %p261 = pneg %p87
        $region26: #{fact_bart_mha.3} parent=19 // pred_check_branch
          %263 = sbr.rel (%p261) target = $region28
        $region27: #{fact_bart_mha.3} parent=19 // pred_region
          %s264 = smul.u32 %s26, 4
          %s265 = sadd.s32 %s264, 8
          %s266 = sadd.s32 %s265, %s27
          %p267 = scmp.lt.s32.totalorder %s266, 23
          %s268 = scalar_select %p267, %s266, 23
          %s269 = smul.addr %s268, 8
          %s270 = scalar_lea.vmem %s1, %s269
          %s271 = smul.u32 %s26, 4
          %s272 = sadd.s32 %s271, 8
          %s273 = sadd.s32 %s272, %s27
        $region28: #{fact_bart_mha.3} parent=19 // pred_fallthru
          _
        // Predicated region
        $region29: #{fact_bart_mha.3} parent=19 // pred_check
          %p274 = pneg %p119
        $region30: #{fact_bart_mha.3} parent=19 // pred_check_branch
          %276 = sbr.rel (%p274) target = $region32
        $region31: #{fact_bart_mha.3} parent=19 // pred_region
          %s277 = smul.u32 %s26, 4
          %s278 = sadd.s32 %s277, 16
          %s279 = sadd.s32 %s278, %s27
          %p280 = scmp.lt.s32.totalorder %s279, 23
          %s281 = scalar_select %p280, %s279, 23
          %s282 = smul.addr %s281, 8
          %s283 = scalar_lea.vmem %s2, %s282
          %s284 = smul.u32 %s26, 4
          %s285 = sadd.s32 %s284, 16
          %s286 = sadd.s32 %s285, %s27
        $region32: #{fact_bart_mha.3} parent=19 // pred_fallthru
          _
        // Predicated region
        $region33: #{fact_bart_mha.3} parent=19 // pred_check
          %p287 = pneg %p145
        $region34: #{fact_bart_mha.3} parent=19 // pred_check_branch
          %289 = sbr.rel (%p287) target = $region36
        $region35: #{fact_bart_mha.3} parent=19 // pred_region
          %p290 = scmp.lt.s32.totalorder %s27, 3
          %s291 = scalar_select %p290, %s27, 3
          %s292 = smul.addr %s291, 8
          %s293 = scalar_lea.vmem %s3, %s292
        $region36: #{fact_bart_mha.3} parent=19 // pred_fallthru
          _
      $region20: #{fact_bart_mha.3} parent=5 // pred_fallthru
        _
      %p294 = scmp.le.s32.totalorder 1, %s19
      %p295 = scmp.lt.s32.totalorder %s19, 9
      %p296 = pnand %p294, %p295
      %p297 = pneg %p296
      // Predicated region
      $region37: #{fact_bart_mha.3} parent=5 // pred_check
        _
      $region38: #{fact_bart_mha.3} parent=5 // pred_check_branch
        %299 = sbr.rel (%p296) target = $region40
      $region39: #{fact_bart_mha.3} parent=5 // pred_region
        %s300 = ssub.s32 %s19, 1
        %s301 = smul.u32 %s28, 4
        %s302 = sadd.s32 %s301, %s29
        %p303 = scmp.lt.s32.totalorder %s302, 23
        %s304 = scalar_select %p303, %s302, 23
        %s305 = smul.addr %s304, 8
        %s306 = scalar_lea.vmem %s0, %s305
        %p307 = pneg %p61
        %p308 = pneg %p58
        %s309 = smul.u32 %s28, 4
        %s310 = sadd.s32 %s309, 8
        %s311 = sadd.s32 %s310, %s29
        %p312 = scmp.lt.s32.totalorder %s311, 23
        %s313 = scalar_select %p312, %s311, 23
        %s314 = smul.addr %s313, 8
        %s315 = scalar_lea.vmem %s1, %s314
        %p316 = pneg %p93
        %p317 = pneg %p90
        %s318 = smul.u32 %s28, 4
        %s319 = sadd.s32 %s318, 16
        %s320 = sadd.s32 %s319, %s29
        %p321 = scmp.lt.s32.totalorder %s320, 23
        %s322 = scalar_select %p321, %s320, 23
        %s323 = smul.addr %s322, 8
        %s324 = scalar_lea.vmem %s2, %s323
        %p325 = pneg %p125
        %p326 = pneg %p122
        %p327 = scmp.lt.s32.totalorder %s29, 3
        %s328 = scalar_select %p327, %s29, 3
        %s329 = smul.addr %s328, 8
        %s330 = scalar_lea.vmem %s3, %s329
        %p331 = pneg %p151
        %p332 = pneg %p148
        %p333 = pneg %p172
        %p334 = pneg %p169
        %p335 = pneg %p198
        %p336 = pneg %p195
        %s337 = sand.u32 %s185, 1
        %s338 = scalar_lea.sflag [#allocation4], %s337
        %s339 = sand.u32 %s185, 1
        %s340 = smul.addr %s339, 8
        %s341 = scalar_lea.vmem [#allocation3], %s340
        %p342 = pneg %p228
        %p343 = pneg %p225
        %s344 = sand.u32 %s215, 1
        %s345 = scalar_lea.sflag [#allocation6], %s344
        %s346 = sand.u32 %s215, 1
        %s347 = smul.addr %s346, 8
        %s348 = scalar_lea.vmem [#allocation5], %s347
        %s349 = smul.u32 %s28, 4
        %s350 = sadd.s32 %s349, %s29
        %p351 = scmp.lt.s32.totalorder %s350, 23
        %s352 = scalar_select %p351, %s350, 23
        %s353 = smul.addr %s352, 8
        %s354 = scalar_lea.vmem %s0, %s353
        %s355 = smul.u32 %s28, 4
        %s356 = sadd.s32 %s355, %s29
        %s357 = smul.u32 %s28, 4
        %s358 = sadd.s32 %s357, 8
        %s359 = sadd.s32 %s358, %s29
        %p360 = scmp.lt.s32.totalorder %s359, 23
        %s361 = scalar_select %p360, %s359, 23
        %s362 = smul.addr %s361, 8
        %s363 = scalar_lea.vmem %s1, %s362
        %s364 = smul.u32 %s28, 4
        %s365 = sadd.s32 %s364, 8
        %s366 = sadd.s32 %s365, %s29
        %s367 = smul.u32 %s28, 4
        %s368 = sadd.s32 %s367, 16
        %s369 = sadd.s32 %s368, %s29
        %p370 = scmp.lt.s32.totalorder %s369, 23
        %s371 = scalar_select %p370, %s369, 23
        %s372 = smul.addr %s371, 8
        %s373 = scalar_lea.vmem %s2, %s372
        %s374 = smul.u32 %s28, 4
        %s375 = sadd.s32 %s374, 16
        %s376 = sadd.s32 %s375, %s29
        %p377 = scmp.lt.s32.totalorder %s29, 3
        %s378 = scalar_select %p377, %s29, 3
        %s379 = smul.addr %s378, 8
        %s380 = scalar_lea.vmem %s3, %s379
        %s381 = smul.u32 %s28, 4
        %s382 = sadd.s32 %s381, %s29
        %p383 = scmp.eq.s32.totalorder %s29, 0
        // Predicated region
        $region41: #{fact_bart_mha.3} parent=39 // pred_check
          %p384 = pneg %p383
        $region42: #{fact_bart_mha.3} parent=39 // pred_check_branch
          %386 = sbr.rel (%p384) target = $region44
        $region43: #{fact_bart_mha.3} parent=39 // pred_region
          %vm387 = vcmask 261120
          %388 = vst.msk [vmem:[#allocation2] sm:$0xff] %vm387, 0.0
        $region44: #{fact_bart_mha.3} parent=39 // pred_fallthru
          _
        %v389 = vld [vmem:[%s354] sm:$0xff]
        %v390 = vld [vmem:[%s363] sm:$0xff]
        %v391 = vld [vmem:[%s373] sm:$0xff]
        %vm392 = vcmask 64512
        %v394 = vsel %vm392, %v389, 0
        %v397 = vsel %vm392, %v390, 0
        %399 = vmatprep.subr.mxu0 0.0
        %400 = vmatpush1.xpose.msra.mxu0 0.0
        %401 = vmatprep.subr.mxu0 0.0
        %402 = vmatpush1.xpose.msra.mxu0 0.0
        %403 = vmatprep.subr.mxu0 0.0
        %404 = vmatpush1.xpose.msra.mxu0 0.0
        %405 = vmatprep.subr.mxu0 0.0
        %406 = vmatpush1.xpose.msra.mxu0 0.0
        %407 = vmatprep.subr.mxu0 0.0
        %408 = vmatpush1.xpose.msra.mxu0 0.0
        %409 = vmatprep.subr.mxu0 0.0
        %410 = vmatpush1.xpose.msra.mxu0 0.0
        %411 = vmatprep.subr.mxu0 0.0
        %412 = vmatpush1.xpose.msra.mxu0 0.0
        %413 = vmatprep.subr.mxu0 0.0
        %414 = vmatpush1.xpose.msra.mxu0 0.0
        %415 = vmatprep.subr.mxu0 0.0
        %416 = vmatpush1.xpose.msra.mxu0 0.0
        %417 = vmatprep.subr.mxu0 0.0
        %418 = vmatpush1.xpose.msra.mxu0 0.0
        %419 = vmatprep.subr.mxu0 0.0
        %420 = vmatpush1.xpose.msra.mxu0 0.0
        %421 = vmatprep.subr.mxu0 0.0
        %422 = vmatpush1.xpose.msra.mxu0 0.0
        %423 = vmatprep.subr.mxu0 0.0
        %424 = vmatpush1.xpose.msra.mxu0 0.0
        %425 = vmatprep.subr.mxu0 0.0
        %426 = vmatpush1.xpose.msra.mxu0 0.0
        %427 = vmatprep.subr.mxu0 0.0
        %428 = vmatpush1.xpose.msra.mxu0 0.0
        %429 = vmatprep.subr.mxu0 0.0
        %430 = vmatpush1.xpose.msra.mxu0 %v397
        %431 = vmatprep.subr.mxu0 0.0
        %432 = vmatpush2.xpose.msra.mxu0 0.0
        %433 = vmatprep.subr.mxu0 0.0
        %434 = vmatpush2.xpose.msra.mxu0 0.0
        %435 = vmatprep.subr.mxu0 0.0
        %436 = vmatpush2.xpose.msra.mxu0 0.0
        %437 = vmatprep.subr.mxu0 0.0
        %438 = vmatpush2.xpose.msra.mxu0 0.0
        %439 = vmatprep.subr.mxu0 0.0
        %440 = vmatpush2.xpose.msra.mxu0 0.0
        %441 = vmatprep.subr.mxu0 0.0
        %442 = vmatpush2.xpose.msra.mxu0 0.0
        %443 = vmatprep.subr.mxu0 0.0
        %444 = vmatpush2.xpose.msra.mxu0 0.0
        %445 = vmatprep.subr.mxu0 0.0
        %446 = vmatpush2.xpose.msra.mxu0 0.0
        %447 = vmatprep.subr.mxu0 0.0
        %448 = vmatpush2.xpose.msra.mxu0 0.0
        %449 = vmatprep.subr.mxu0 0.0
        %450 = vmatpush2.xpose.msra.mxu0 0.0
        %451 = vmatprep.subr.mxu0 0.0
        %452 = vmatpush2.xpose.msra.mxu0 0.0
        %453 = vmatprep.subr.mxu0 0.0
        %454 = vmatpush2.xpose.msra.mxu0 0.0
        %455 = vmatprep.subr.mxu0 0.0
        %456 = vmatpush2.xpose.msra.mxu0 0.0
        %457 = vmatprep.subr.mxu0 0.0
        %458 = vmatpush2.xpose.msra.mxu0 0.0
        %459 = vmatprep.subr.mxu0 0.0
        %460 = vmatpush2.xpose.msra.mxu0 0.0
        %461 = vmatprep.subr.mxu0 0.0
        %462 = vmatpush2.xpose.msra.mxu0 0.0
        %463 = vmatprep.mubr.f32.mxu0 0.0
        %464 = vmatmul.mubr.f32.gmra.mxu0 %v394
        %v465 = vpop.f32.mrf.mxu0
        %v466 = vadd.f32 0.0, %v465
        %v467 = vpop.f32.mrf.mxu0
        %468 = vdwg.mxu0
        %v469 = vsel %vm392, %v466, -inf
        %470 = vmax.xlane.f32.xlu0 %v469
        %v471 = vpop.xlane.xlu0 %470
        %v472 = vsub.f32 %v466, %v471
        %v473 = vmul.f32 %v472, 1.442695
        %v474 = vpow.pop %v473
        %v475 = vsel %vm392, %v474, 0.0
        %476 = vadd.xlane.f32.xlu0 %v475
        %v477 = vpop.xlane.xlu0 %476
        %v478 = vrcp.pop %v477
        %v479 = vmul.f32 %v474, %v478
        %480 = vst.msk [vmem:[%s348] sm:$0xff] %vm392, %v479
        %v482 = vsel %vm392, %v479, 0
        %484 = vmatprep.subr.mxu0 0.0
        %485 = vmatpush1.msra.mxu0 0.0
        %486 = vmatprep.subr.mxu0 0.0
        %487 = vmatpush1.msra.mxu0 0.0
        %488 = vmatprep.subr.mxu0 0.0
        %489 = vmatpush1.msra.mxu0 0.0
        %490 = vmatprep.subr.mxu0 0.0
        %491 = vmatpush1.msra.mxu0 0.0
        %492 = vmatprep.subr.mxu0 0.0
        %493 = vmatpush1.msra.mxu0 0.0
        %494 = vmatprep.subr.mxu0 0.0
        %495 = vmatpush1.msra.mxu0 0.0
        %496 = vmatprep.subr.mxu0 0.0
        %497 = vmatpush1.msra.mxu0 0.0
        %498 = vmatprep.subr.mxu0 0.0
        %499 = vmatpush1.msra.mxu0 0.0
        %500 = vmatprep.subr.mxu0 0.0
        %501 = vmatpush1.msra.mxu0 0.0
        %502 = vmatprep.subr.mxu0 0.0
        %503 = vmatpush1.msra.mxu0 0.0
        %504 = vmatprep.subr.mxu0 0.0
        %505 = vmatpush1.msra.mxu0 0.0
        %506 = vmatprep.subr.mxu0 0.0
        %507 = vmatpush1.msra.mxu0 0.0
        %508 = vmatprep.subr.mxu0 0.0
        %509 = vmatpush1.msra.mxu0 0.0
        %510 = vmatprep.subr.mxu0 0.0
        %511 = vmatpush1.msra.mxu0 0.0
        %512 = vmatprep.subr.mxu0 0.0
        %513 = vmatpush1.msra.mxu0 0.0
        %514 = vmatprep.subr.mxu0 0.0
        %515 = vmatpush1.msra.mxu0 %v391
        %516 = vmatprep.subr.mxu0 0.0
        %517 = vmatpush2.msra.mxu0 0.0
        %518 = vmatprep.subr.mxu0 0.0
        %519 = vmatpush2.msra.mxu0 0.0
        %520 = vmatprep.subr.mxu0 0.0
        %521 = vmatpush2.msra.mxu0 0.0
        %522 = vmatprep.subr.mxu0 0.0
        %523 = vmatpush2.msra.mxu0 0.0
        %524 = vmatprep.subr.mxu0 0.0
        %525 = vmatpush2.msra.mxu0 0.0
        %526 = vmatprep.subr.mxu0 0.0
        %527 = vmatpush2.msra.mxu0 0.0
        %528 = vmatprep.subr.mxu0 0.0
        %529 = vmatpush2.msra.mxu0 0.0
        %530 = vmatprep.subr.mxu0 0.0
        %531 = vmatpush2.msra.mxu0 0.0
        %532 = vmatprep.subr.mxu0 0.0
        %533 = vmatpush2.msra.mxu0 0.0
        %534 = vmatprep.subr.mxu0 0.0
        %535 = vmatpush2.msra.mxu0 0.0
        %536 = vmatprep.subr.mxu0 0.0
        %537 = vmatpush2.msra.mxu0 0.0
        %538 = vmatprep.subr.mxu0 0.0
        %539 = vmatpush2.msra.mxu0 0.0
        %540 = vmatprep.subr.mxu0 0.0
        %541 = vmatpush2.msra.mxu0 0.0
        %542 = vmatprep.subr.mxu0 0.0
        %543 = vmatpush2.msra.mxu0 0.0
        %544 = vmatprep.subr.mxu0 0.0
        %545 = vmatpush2.msra.mxu0 0.0
        %546 = vmatprep.subr.mxu0 0.0
        %547 = vmatpush2.msra.mxu0 0.0
        %548 = vmatprep.mubr.f32.mxu0 0.0
        %549 = vmatmul.mubr.f32.gmra.mxu0 %v482
        %v550 = vpop.f32.mrf.mxu0
        %v551 = vadd.f32 0.0, %v550
        %v552 = vpop.f32.mrf.mxu0
        %553 = vdwg.mxu0
        %v554 = vld [vmem:[#allocation2] sm:$0xff]
        %v555 = vld [vmem:[%s380] sm:$0xff]
        %v557 = vsel %vm392, %v551, 0
        %559 = vmatprep.subr.mxu0 0.0
        %560 = vmatpush1.msra.mxu0 0.0
        %561 = vmatprep.subr.mxu0 0.0
        %562 = vmatpush1.msra.mxu0 0.0
        %563 = vmatprep.subr.mxu0 0.0
        %564 = vmatpush1.msra.mxu0 0.0
        %565 = vmatprep.subr.mxu0 0.0
        %566 = vmatpush1.msra.mxu0 0.0
        %567 = vmatprep.subr.mxu0 0.0
        %568 = vmatpush1.msra.mxu0 0.0
        %569 = vmatprep.subr.mxu0 0.0
        %570 = vmatpush1.msra.mxu0 0.0
        %571 = vmatprep.subr.mxu0 0.0
        %572 = vmatpush1.msra.mxu0 0.0
        %573 = vmatprep.subr.mxu0 0.0
        %574 = vmatpush1.msra.mxu0 0.0
        %575 = vmatprep.subr.mxu0 0.0
        %576 = vmatpush1.msra.mxu0 0.0
        %577 = vmatprep.subr.mxu0 0.0
        %578 = vmatpush1.msra.mxu0 0.0
        %579 = vmatprep.subr.mxu0 0.0
        %580 = vmatpush1.msra.mxu0 0.0
        %581 = vmatprep.subr.mxu0 0.0
        %582 = vmatpush1.msra.mxu0 0.0
        %583 = vmatprep.subr.mxu0 0.0
        %584 = vmatpush1.msra.mxu0 0.0
        %585 = vmatprep.subr.mxu0 0.0
        %586 = vmatpush1.msra.mxu0 0.0
        %587 = vmatprep.subr.mxu0 0.0
        %588 = vmatpush1.msra.mxu0 0.0
        %589 = vmatprep.subr.mxu0 0.0
        %590 = vmatpush1.msra.mxu0 %v555
        %591 = vmatprep.subr.mxu0 0.0
        %592 = vmatpush2.msra.mxu0 0.0
        %593 = vmatprep.subr.mxu0 0.0
        %594 = vmatpush2.msra.mxu0 0.0
        %595 = vmatprep.subr.mxu0 0.0
        %596 = vmatpush2.msra.mxu0 0.0
        %597 = vmatprep.subr.mxu0 0.0
        %598 = vmatpush2.msra.mxu0 0.0
        %599 = vmatprep.subr.mxu0 0.0
        %600 = vmatpush2.msra.mxu0 0.0
        %601 = vmatprep.subr.mxu0 0.0
        %602 = vmatpush2.msra.mxu0 0.0
        %603 = vmatprep.subr.mxu0 0.0
        %604 = vmatpush2.msra.mxu0 0.0
        %605 = vmatprep.subr.mxu0 0.0
        %606 = vmatpush2.msra.mxu0 0.0
        %607 = vmatprep.subr.mxu0 0.0
        %608 = vmatpush2.msra.mxu0 0.0
        %609 = vmatprep.subr.mxu0 0.0
        %610 = vmatpush2.msra.mxu0 0.0
        %611 = vmatprep.subr.mxu0 0.0
        %612 = vmatpush2.msra.mxu0 0.0
        %613 = vmatprep.subr.mxu0 0.0
        %614 = vmatpush2.msra.mxu0 0.0
        %615 = vmatprep.subr.mxu0 0.0
        %616 = vmatpush2.msra.mxu0 0.0
        %617 = vmatprep.subr.mxu0 0.0
        %618 = vmatpush2.msra.mxu0 0.0
        %619 = vmatprep.subr.mxu0 0.0
        %620 = vmatpush2.msra.mxu0 0.0
        %621 = vmatprep.subr.mxu0 0.0
        %622 = vmatpush2.msra.mxu0 0.0
        %623 = vmatprep.mubr.f32.mxu0 0.0
        %624 = vmatmul.mubr.f32.gmra.mxu0 %v557
        %v625 = vpop.f32.mrf.mxu0
        %v626 = vadd.f32 0.0, %v625
        %v627 = vpop.f32.mrf.mxu0
        %628 = vdwg.mxu0
        %v629 = vadd.f32 %v554, %v626
        %vm630 = vcmask 261120
        %631 = vst.msk [vmem:[#allocation2] sm:$0xff] %vm630, %v629
        %p632 = scmp.eq.s32.totalorder %s29, 3
        // Predicated region
        $region45: #{fact_bart_mha.3} parent=39 // pred_check
          %p633 = pneg %p632
        $region46: #{fact_bart_mha.3} parent=39 // pred_check_branch
          %635 = sbr.rel (%p633) target = $region48
        $region47: #{fact_bart_mha.3} parent=39 // pred_region
          %v636 = vld [vmem:[#allocation2] sm:$0xff]
          %v637 = vld [vmem:[%s4] sm:$0x1]
          %v639 = vlaneseq
          %v640 = vshrl.u32 %v639, 7
          %v641 = vsub.s32 0, %v640
          %v642 = vrot.slane %v637, %v641
          %v644 = vadd.f32 %v636, %v642
          %645 = vst.msk [vmem:[%s341] sm:$0xff] %vm630, %v644
        $region48: #{fact_bart_mha.3} parent=39 // pred_fallthru
          _
        %s646 = sand.u32 %s185, 1
        %s647 = scalar_lea.sflag [#allocation4], %s646
        %s648 = sand.u32 %s185, 1
        %s649 = smul.addr %s648, 8
        %s650 = scalar_lea.vmem [#allocation3], %s649
        %s651 = sand.u32 %s215, 1
        %s652 = scalar_lea.sflag [#allocation6], %s651
        %s653 = sand.u32 %s215, 1
        %s654 = smul.addr %s653, 8
        %s655 = scalar_lea.vmem [#allocation5], %s654
        // Predicated region
        $region49: #{fact_bart_mha.3} parent=39 // pred_check
          %p656 = pneg %p195
        $region50: #{fact_bart_mha.3} parent=39 // pred_check_branch
          %658 = sbr.rel (%p656) target = $region52
        $region51: #{fact_bart_mha.3} parent=39 // pred_region
          %s660 = ssub.s32 128, 128
          %661 = vsyncadd %s647, %s660
          %s662 = smul.addr %s28, 128
          %s663 = scalar_lea.hbm %s5, %s662
          %s665 = sshll.u32 %s650, 4
          %s666 = int_to_ptr.vmem [resolvable:$true] %s665
          %668 = dma.vmem_to_hbm [thread:$0]  %s666, 128, %s663, %s647
        $region52: #{fact_bart_mha.3} parent=39 // pred_fallthru
          _
        // Predicated region
        $region53: #{fact_bart_mha.3} parent=39 // pred_check
          %p669 = pneg %p225
        $region54: #{fact_bart_mha.3} parent=39 // pred_check_branch
          %671 = sbr.rel (%p669) target = $region56
        $region55: #{fact_bart_mha.3} parent=39 // pred_region
          %s672 = smul.u32 %s28, 4
          %s673 = sadd.s32 %s672, %s29
          %s675 = ssub.s32 128, 128
          %676 = vsyncadd %s652, %s675
          %s677 = smul.addr %s673, 128
          %s678 = scalar_lea.hbm %s6, %s677
          %s680 = sshll.u32 %s655, 4
          %s681 = int_to_ptr.vmem [resolvable:$true] %s680
          %683 = dma.vmem_to_hbm [thread:$0]  %s681, 128, %s678, %s652
        $region56: #{fact_bart_mha.3} parent=39 // pred_fallthru
          _
      $region40: #{fact_bart_mha.3} parent=5 // pred_fallthru
        _
      %p684 = scmp.le.s32.totalorder 2, %s19
      // Predicated region
      $region57: #{fact_bart_mha.3} parent=5 // pred_check
        %p685 = pneg %p684
      $region58: #{fact_bart_mha.3} parent=5 // pred_check_branch
        %687 = sbr.rel (%p685) target = $region60
      $region59: #{fact_bart_mha.3} parent=5 // pred_region
        %s688 = ssub.s32 %s19, 2
        // Predicated region
        $region61: #{fact_bart_mha.3} parent=59 // pred_check
          %p689 = pneg %p201
        $region62: #{fact_bart_mha.3} parent=59 // pred_check_branch
          %691 = sbr.rel (%p689) target = $region64
        $region63: #{fact_bart_mha.3} parent=59 // pred_region
          %s692 = sand.u32 %s186, 1
          %s693 = scalar_lea.sflag [#allocation4], %s692
          %s694 = sand.u32 %s186, 1
          %s695 = smul.addr %s694, 8
          %s696 = scalar_lea.vmem [#allocation3], %s695
          %697 = dma.done %s693, 128
        $region64: #{fact_bart_mha.3} parent=59 // pred_fallthru
          _
        // Predicated region
        $region65: #{fact_bart_mha.3} parent=59 // pred_check
          %p698 = pneg %p231
        $region66: #{fact_bart_mha.3} parent=59 // pred_check_branch
          %700 = sbr.rel (%p698) target = $region68
        $region67: #{fact_bart_mha.3} parent=59 // pred_region
          %s701 = sand.u32 %s216, 1
          %s702 = scalar_lea.sflag [#allocation6], %s701
          %s703 = sand.u32 %s216, 1
          %s704 = smul.addr %s703, 8
          %s705 = scalar_lea.vmem [#allocation5], %s704
          %706 = dma.done %s702, 128
        $region68: #{fact_bart_mha.3} parent=59 // pred_fallthru
          _
      $region60: #{fact_bart_mha.3} parent=5 // pred_fallthru
        _
    $region6: #{fact_bart_mha.3} parent=1 // loop_footer
      %s23 = sadd.s32 1, %s19
    $region7: #{fact_bart_mha.3} parent=1 // loop_footer_branch
      %18 = sbr.rel target = $region3
    $region8: #{fact_bart_mha.3} parent=1 // loop_exit
      _
    %707 = vsyncpa [#allocation4], 1
    %s708 = scalar_lea.sflag [#allocation4], 1
    %709 = vsyncpa %s708, 1
    %710 = vsyncpa [#allocation6], 1
    %s711 = scalar_lea.sflag [#allocation6], 1
    %712 = vsyncpa %s711, 1

</llo_original>
